<compile_context>
chip_gen: v5e
topology: v5e:2x2
jax: 0.10.0
libtpu: 0.0.40
codegen_flags: <defaults>
</compile_context>

<pallas_src>
import functools
import math

import jax
import jax.numpy as jnp
from jax.experimental import pallas as pl
from jax.experimental.pallas import tpu as pltpu


# ---------------------------------------------------------------------------
# Kernels
# ---------------------------------------------------------------------------
def _pe_add_kernel(x_ref, pe_ref, o_ref):
    # x_ref: (TS, B, D), pe_ref: (TS, 1, D) -> broadcast add over the batch
    # (sublane) axis; pure streaming elementwise op.
    o_ref[...] = x_ref[...] + pe_ref[...]


def _pe_add_dropout_kernel(x_ref, pe_ref, bits_ref, o_ref, *, threshold, scale):
    # Inverted dropout fused with the positional-encoding add.
    # bits_ref holds int32 uniform values in [0, 2**31); an element is kept
    # iff bits < threshold, threshold = round((1 - p) * 2**31).
    y = x_ref[...] + pe_ref[...]
    keep = bits_ref[...] < threshold            # integer compare, no float uniform
    o_ref[...] = jnp.where(keep, y * scale, jnp.zeros_like(y))


# ---------------------------------------------------------------------------
# Parameter setup (mirrors PositionalEncoding.__init__)
# ---------------------------------------------------------------------------
def make_positional_encoding_table(d_model: int, max_len: int = 5000) -> jnp.ndarray:
    position = jnp.arange(0, max_len, dtype=jnp.float32)[:, None]            # (max_len, 1)
    div_term = jnp.exp(
        jnp.arange(0, d_model, 2, dtype=jnp.float32) * (-math.log(10000.0) / d_model)
    )                                                                         # (d_model/2,)
    pe = jnp.zeros((max_len, d_model), dtype=jnp.float32)
    pe = pe.at[:, 0::2].set(jnp.sin(position * div_term))
    pe = pe.at[:, 1::2].set(jnp.cos(position * div_term))
    # unsqueeze(0).transpose(0, 1) -> (max_len, 1, d_model)
    return pe[:, None, :]


# ---------------------------------------------------------------------------
# Wrapper
# ---------------------------------------------------------------------------
def _tile_rows(seq_len: int, row_bytes: int, target_bytes: int = 2 * 1024 * 1024) -> int:
    """Pick a sequence-tile length so one x block is ~target_bytes."""
    rows = max(1, target_bytes // max(1, row_bytes))
    if rows >= seq_len:
        return seq_len
    if rows >= 8:
        rows = (rows // 8) * 8   # friendly sublane multiple
    return rows


def positional_encoding_forward(
    x: jnp.ndarray,       # (S, B, D)
    pe: jnp.ndarray,      # (max_len, 1, D)
    *,
    p: float = 0.1,
    training: bool = False,
    seed: int = 0,
) -> jnp.ndarray:
    S, B, D = x.shape
    pe_slice = pe[:S].astype(x.dtype)                 # (S, 1, D), match x dtype

    ts = _tile_rows(S, B * D * x.dtype.itemsize)
    grid = (pl.cdiv(S, ts),)

    x_spec = pl.BlockSpec((ts, B, D), lambda i: (i, 0, 0))
    pe_spec = pl.BlockSpec((ts, 1, D), lambda i: (i, 0, 0))
    out_spec = pl.BlockSpec((ts, B, D), lambda i: (i, 0, 0))

    compiler_params = pltpu.CompilerParams(dimension_semantics=("parallel",))
    # Output aliases x's HBM buffer (shape/dtype preserving elementwise op).
    # Only enabled when actually targeting TPU hardware; harmless either way
    # because the kernel fully overwrites every output block.
    io_alias = {0: 0} if jax.default_backend() == "tpu" else {}

    if (not training) or p <= 0.0:
        # eval mode: nn.Dropout is identity
        return pl.pallas_call(
            _pe_add_kernel,
            out_shape=jax.ShapeDtypeStruct((S, B, D), x.dtype),
            grid=grid,
            in_specs=[x_spec, pe_spec],
            out_specs=out_spec,
            compiler_params=compiler_params,
            input_output_aliases=io_alias,
        )(x, pe_slice)

    if p >= 1.0:
        return jnp.zeros_like(x)

    # Training: inverted dropout fused with the add.
    # TODO(synk): on real TPU the random bits could be produced in-kernel with
    # pltpu.prng_seed / pltpu.prng_random_bits (seeded per grid step) to avoid
    # streaming them from HBM, but those primitives have no CPU/interpret
    # lowering, so the bits are generated once in the wrapper instead.
    bits = jax.random.bits(jax.random.PRNGKey(seed), (S, B, D), dtype=jnp.uint32)
    bits = (bits >> 1).astype(jnp.int32)              # uniform in [0, 2**31)
    threshold = min(int(round((1.0 - p) * float(2 ** 31))), 2 ** 31 - 1)
    scale = 1.0 / (1.0 - p)

    kernel = functools.partial(_pe_add_dropout_kernel, threshold=threshold, scale=scale)
    bits_spec = pl.BlockSpec((ts, B, D), lambda i: (i, 0, 0))
    return pl.pallas_call(
        kernel,
        out_shape=jax.ShapeDtypeStruct((S, B, D), x.dtype),
        grid=grid,
        in_specs=[x_spec, pe_spec, bits_spec],
        out_specs=out_spec,
        compiler_params=compiler_params,
        input_output_aliases=io_alias,
    )(x, pe_slice, bits)


# ---------------------------------------------------------------------------
# Main
# ---------------------------------------------------------------------------
if __name__ == "__main__":
    d_model = 32
    max_len = 64          # small max_len for the synthetic test (module default is 5000)
    S, B = 8, 2
    p = 0.1

    key = jax.random.PRNGKey(0)
    x = jax.random.normal(key, (S, B, d_model), dtype=jnp.float32)
    pe = make_positional_encoding_table(d_model, max_len)

    # Reference computed before any (possibly aliased) kernel call.
    ref = x + pe[:S]

    # eval mode (dropout = identity) -> deterministic check vs reference
    out = jax.block_until_ready(positional_encoding_forward(x, pe, p=p, training=False))
    assert out.shape == (S, B, d_model)
    assert jnp.allclose(out, ref, atol=1e-6, rtol=1e-6)

    # training mode (fused add + inverted dropout)
    out_train = jax.block_until_ready(
        positional_encoding_forward(x, pe, p=p, training=True, seed=1234)
    )
    assert out_train.shape == (S, B, d_model)
    scale = 1.0 / (1.0 - p)
    kept = jnp.isclose(out_train, ref * scale, atol=1e-5)
    dropped = jnp.isclose(out_train, 0.0, atol=1e-7)
    assert bool(jnp.all(kept | dropped))
    frac_kept = float(jnp.mean(kept.astype(jnp.float32)))
    assert 0.7 < frac_kept < 0.999   # ~1-p of elements kept

    print("KERNEL_OK")
</pallas_src>

<mosaic_0001>
module attributes {stable_mosaic.version = 11 : i64} {
  func.func @_pe_add_kernel(%arg0: i32, %arg1: memref<8x2x32xf32, #tpu.memory_space<vmem>>, %arg2: memref<8x1x32xf32, #tpu.memory_space<vmem>>, %arg3: memref<8x2x32xf32, #tpu.memory_space<vmem>>) attributes {dimension_semantics = [#tpu.dimension_semantics<parallel>], iteration_bounds = array<i64: 1>, scalar_prefetch = 0 : i64, scratch_operands = 0 : i64, tpu.core_type = #tpu.core_type<tc>, window_params = [{transform_indices = @transform_0, window_bounds = array<i64: 8, 2, 32>}, {transform_indices = @transform_1, window_bounds = array<i64: 8, 1, 32>}, {transform_indices = @transform_2, window_bounds = array<i64: 8, 2, 32>}]} {
    %c0 = arith.constant 0 : index
    %c0_0 = arith.constant 0 : index
    %c0_1 = arith.constant 0 : index
    %0 = vector.load %arg1[%c0, %c0_0, %c0_1] : memref<8x2x32xf32, #tpu.memory_space<vmem>>, vector<8x2x32xf32>
    %c0_2 = arith.constant 0 : index
    %c0_3 = arith.constant 0 : index
    %c0_4 = arith.constant 0 : index
    %1 = vector.load %arg2[%c0_2, %c0_3, %c0_4] : memref<8x1x32xf32, #tpu.memory_space<vmem>>, vector<8x1x32xf32>
    %2 = vector.broadcast %1 : vector<8x1x32xf32> to vector<8x2x32xf32>
    %3 = arith.addf %0, %2 : vector<8x2x32xf32>
    %c0_5 = arith.constant 0 : index
    %c0_6 = arith.constant 0 : index
    %c0_7 = arith.constant 0 : index
    %4 = vector.load %arg3[%c0_5, %c0_6, %c0_7] : memref<8x2x32xf32, #tpu.memory_space<vmem>>, vector<8x2x32xf32>
    tpu.vector_store %arg3[%c0_5, %c0_6, %c0_7], %3 {strides = array<i32>} : memref<8x2x32xf32, #tpu.memory_space<vmem>>, vector<8x2x32xf32>,
    return
  }
  func.func @transform_0(%arg0: i32) -> (i32, i32, i32) {
    %c0_i32 = arith.constant 0 : i32
    %c0_i32_0 = arith.constant 0 : i32
    %c0_i32_1 = arith.constant 0 : i32
    return %arg0, %c0_i32, %c0_i32_0 : i32, i32, i32
  }
  func.func @transform_1(%arg0: i32) -> (i32, i32, i32) {
    %c0_i32 = arith.constant 0 : i32
    %c0_i32_0 = arith.constant 0 : i32
    %c0_i32_1 = arith.constant 0 : i32
    return %arg0, %c0_i32, %c0_i32_0 : i32, i32, i32
  }
  func.func @transform_2(%arg0: i32) -> (i32, i32, i32) {
    %c0_i32 = arith.constant 0 : i32
    %c0_i32_0 = arith.constant 0 : i32
    %c0_i32_1 = arith.constant 0 : i32
    return %arg0, %c0_i32, %c0_i32_0 : i32, i32, i32
  }
}

</mosaic_0001>

<llo_original>
// kernel: tpu_custom_call.1
$region0: #{tpu_custom_call.1}
  #allocation0 [shape = 'u32[]', space=smem, size = 0x4, offset = 0x4, fixed_abs, tag = 'smem constant byte address 0x4 - core index']
  #allocation1 [shape = 'u32[72,128]{1,0:T(1,128)}', space=vmem, size = 0x9000, scoped, tag = 'internal scratch']
  %s0 = inlined_call_operand.hbm [shape: f32[8,2,32], index: 0, kind: input, shape index: {}]
  %s1 = inlined_call_operand.hbm [shape: f32[8,1,32], index: 1, kind: input, shape index: {}]
  %s2 = inlined_call_operand.hbm [shape: f32[8,2,32], index: 2, kind: output, shape index: {}]
  %s3 = sld [smem:[#allocation0]]
  $region26: #{tpu_custom_call.1} parent=0
    _
  %s5 = ssub.s32 1, %s3
  %s6 = scalar_select 0, %s5, %s3
  $region1: #{tpu_custom_call.1} parent=0
    #allocation2 [shape = 'u8[8192]{0}', space=vmem, size = 0x2000, scoped, tag = 'input window, operand 0, single buffered']
    #allocation3 [shape = 's32[1]{0}', space=sflag, size = 0x4, scoped, tag = 'scoped memory for tpu_custom_call.1']
    #allocation4 [shape = 's32[1]{0}', space=sflag, size = 0x4, scoped, tag = 'scoped memory for tpu_custom_call.1']
    #allocation5 [shape = 'u8[4096]{0}', space=vmem, size = 0x1000, scoped, tag = 'input window, operand 1, single buffered']
    #allocation6 [shape = 's32[1]{0}', space=sflag, size = 0x4, scoped, tag = 'scoped memory for tpu_custom_call.1']
    #allocation7 [shape = 'u8[8192]{0}', space=vmem, size = 0x2000, scoped, tag = 'output window, operand 0, single buffered']
    %7 = vsyncpa [#allocation3], 0
    %8 = vsyncpa [#allocation6], 0
    %9 = vsyncpa [#allocation4], 0
    // Predicated region
    $region2: #{tpu_custom_call.1} parent=1 // pred_check
      _
    $region3: #{tpu_custom_call.1} parent=1 // pred_check_branch
      %11 = sbr.rel (0) target = $region5
    $region4: #{tpu_custom_call.1} parent=1 // pred_region
      %13 = vsyncadd [#allocation3], 0
      %s14 = sshll.u32 %s0, 4
      %s15 = int_to_ptr.hbm [resolvable:$true] %s14
      %s16 = sshll.u32 [#allocation2], 4
      %s17 = int_to_ptr.vmem [resolvable:$true] %s16
      %22 = dma.hbm_to_vmem [thread:$0]  %s15, 256, %s17, [#allocation3], 32, 32, 2
    $region5: #{tpu_custom_call.1} parent=1 // pred_fallthru
      _
    // Predicated region
    $region6: #{tpu_custom_call.1} parent=1 // pred_check
      _
    $region7: #{tpu_custom_call.1} parent=1 // pred_check_branch
      %24 = sbr.rel (0) target = $region9
    $region8: #{tpu_custom_call.1} parent=1 // pred_region
      %26 = vsyncadd [#allocation6], 0
      %s27 = sshll.u32 %s1, 4
      %s28 = int_to_ptr.hbm [resolvable:$true] %s27
      %s29 = sshll.u32 [#allocation5], 4
      %s30 = int_to_ptr.vmem [resolvable:$true] %s29
      %35 = dma.hbm_to_vmem [thread:$0]  %s28, 128, %s30, [#allocation6], 16, 16, 1
    $region9: #{tpu_custom_call.1} parent=1 // pred_fallthru
      _
    // Predicated region
    $region10: #{tpu_custom_call.1} parent=1 // pred_check
      _
    $region11: #{tpu_custom_call.1} parent=1 // pred_check_branch
      %37 = sbr.rel (0) target = $region13
    $region12: #{tpu_custom_call.1} parent=1 // pred_region
      %39 = dma.done [#allocation3], 256
    $region13: #{tpu_custom_call.1} parent=1 // pred_fallthru
      _
    // Predicated region
    $region14: #{tpu_custom_call.1} parent=1 // pred_check
      _
    $region15: #{tpu_custom_call.1} parent=1 // pred_check_branch
      %41 = sbr.rel (0) target = $region17
    $region16: #{tpu_custom_call.1} parent=1 // pred_region
      %43 = dma.done [#allocation6], 128
    $region17: #{tpu_custom_call.1} parent=1 // pred_fallthru
      _
    %v44 = vld [vmem:[#allocation2] sm:$0x3]
    %v45 = vld [vmem:[#allocation2 + $0x2] sm:$0x3]
    %v46 = vld [vmem:[#allocation2 + $0x4] sm:$0x3]
    %v47 = vld [vmem:[#allocation2 + $0x6] sm:$0x3]
    %v48 = vld [vmem:[#allocation2 + $0x8] sm:$0x3]
    %v49 = vld [vmem:[#allocation2 + $0xa] sm:$0x3]
    %v50 = vld [vmem:[#allocation2 + $0xc] sm:$0x3]
    %v51 = vld [vmem:[#allocation2 + $0xe] sm:$0x3]
    %v52 = vld [vmem:[#allocation5] sm:$0x1]
    %v53 = vld [vmem:[#allocation5 + $0x1] sm:$0x1]
    %v54 = vld [vmem:[#allocation5 + $0x2] sm:$0x1]
    %v55 = vld [vmem:[#allocation5 + $0x3] sm:$0x1]
    %v56 = vld [vmem:[#allocation5 + $0x4] sm:$0x1]
    %v57 = vld [vmem:[#allocation5 + $0x5] sm:$0x1]
    %v58 = vld [vmem:[#allocation5 + $0x6] sm:$0x1]
    %v59 = vld [vmem:[#allocation5 + $0x7] sm:$0x1]
    %v68 = vperm.slane %v52, 0
    %v69 = vperm.slane %v53, 0
    %v70 = vperm.slane %v54, 0
    %v71 = vperm.slane %v55, 0
    %v72 = vperm.slane %v56, 0
    %v73 = vperm.slane %v57, 0
    %v74 = vperm.slane %v58, 0
    %v75 = vperm.slane %v59, 0
    %v84 = vadd.f32 %v44, %v68
    %v85 = vadd.f32 %v45, %v69
    %v86 = vadd.f32 %v46, %v70
    %v87 = vadd.f32 %v47, %v71
    %v88 = vadd.f32 %v48, %v72
    %v89 = vadd.f32 %v49, %v73
    %v90 = vadd.f32 %v50, %v74
    %v91 = vadd.f32 %v51, %v75
    %vm92 = vcmask 254976
    %93 = vst.msk [vmem:[#allocation7] sm:$0x3] %vm92, %v84
    %94 = vst.msk [vmem:[#allocation7 + $0x2] sm:$0x3] %vm92, %v85
    %95 = vst.msk [vmem:[#allocation7 + $0x4] sm:$0x3] %vm92, %v86
    %96 = vst.msk [vmem:[#allocation7 + $0x6] sm:$0x3] %vm92, %v87
    %97 = vst.msk [vmem:[#allocation7 + $0x8] sm:$0x3] %vm92, %v88
    %98 = vst.msk [vmem:[#allocation7 + $0xa] sm:$0x3] %vm92, %v89
    %99 = vst.msk [vmem:[#allocation7 + $0xc] sm:$0x3] %vm92, %v90
    %100 = vst.msk [vmem:[#allocation7 + $0xe] sm:$0x3] %vm92, %v91
    // Predicated region
    $region18: #{tpu_custom_call.1} parent=1 // pred_check
      _
    $region19: #{tpu_custom_call.1} parent=1 // pred_check_branch
      %102 = sbr.rel (0) target = $region21
    $region20: #{tpu_custom_call.1} parent=1 // pred_region
      %104 = vsyncadd [#allocation4], 0
      %s105 = sshll.u32 [#allocation7], 4
      %s106 = int_to_ptr.vmem [resolvable:$true] %s105
      %s107 = sshll.u32 %s2, 4
      %s108 = int_to_ptr.hbm [resolvable:$true] %s107
      %113 = dma.vmem_to_hbm [thread:$0]  %s106, 256, %s108, [#allocation4], 32, 32, 2
    $region21: #{tpu_custom_call.1} parent=1 // pred_fallthru
      _
    // Predicated region
    $region22: #{tpu_custom_call.1} parent=1 // pred_check
      _
    $region23: #{tpu_custom_call.1} parent=1 // pred_check_branch
      %115 = sbr.rel (0) target = $region25
    $region24: #{tpu_custom_call.1} parent=1 // pred_region
      %117 = dma.done [#allocation4], 256
    $region25: #{tpu_custom_call.1} parent=1 // pred_fallthru
      _
    %118 = vsyncpa [#allocation3], 1
    %119 = vsyncpa [#allocation6], 1
    %120 = vsyncpa [#allocation4], 1

</llo_original>
